<compile_context>
chip_gen: v5e
topology: v5e:2x2
jax: 0.10.0
libtpu: 0.0.40
codegen_flags: <defaults>
</compile_context>

<pallas_src>
import jax
import jax.numpy as jnp
from jax.experimental import pallas as pl
from jax.experimental.pallas import tpu as pltpu


_UINT8_MAX = 255.0          # max value of the source integer dtype (torch.uint8)
_INV_UINT8_MAX = 1.0 / 255.0

_LANE_W = 1024              # lane-dense last dim: large multiple of 128 -> unmasked vst
_MAX_TILE_ROWS = 768        # multiple of 32 (uint8 sublane packing);
                            # double-buffered working set ~= 10 * 768 * 1024 B ~= 7.5 MiB
                            # -> fits v5e's 16 MiB scoped VMEM default and v7x's 64 MiB VMEM.


def _convert_dtype_kernel(x_ref, o_ref):
    # Elementwise: cast uint8 -> f32, scale to [0, 1] via reciprocal multiply,
    # cast to output dtype.  Mem-bound; the compute is filler under the DMAs.
    x = x_ref[...].astype(jnp.float32)
    o_ref[...] = (x * jnp.float32(_INV_UINT8_MAX)).astype(o_ref.dtype)


def convert_image_dtype(image: jax.Array, dtype=jnp.float32) -> jax.Array:
    """Pallas equivalent of torchvision F.convert_image_dtype(image, dtype)
    for uint8 integer inputs and floating target dtypes."""
    assert image.dtype == jnp.uint8, "this kernel handles uint8 inputs"
    assert jnp.issubdtype(dtype, jnp.floating), "target dtype must be floating"
    # TODO(synk): float->int and int->int conversion branches of
    # F.convert_image_dtype are not exercised here (module used with float targets).

    orig_shape = image.shape
    total = image.size
    out_itemsize = jnp.dtype(dtype).itemsize

    # Flatten to a lane-dense 2D slab (rows, 1024); pad the tail in the
    # wrapper so the last dim is always a large, 128-aligned width.
    flat = image.reshape(-1)
    padded_total = pl.cdiv(total, _LANE_W) * _LANE_W
    if padded_total != total:
        flat = jnp.pad(flat, (0, padded_total - total))
    rows = padded_total // _LANE_W
    x2d = flat.reshape(rows, _LANE_W)

    # Tile over rows.  If the whole slab is smaller than one tile, use the
    # full row extent (a block dim equal to the full array dim is always legal).
    tm = rows if rows <= _MAX_TILE_ROWS else _MAX_TILE_ROWS
    grid = (pl.cdiv(rows, tm),)

    cost = pl.CostEstimate(
        flops=2 * total,                       # cast + multiply per element
        transcendentals=0,
        bytes_accessed=total * 1 + total * out_itemsize,
    )

    out2d = pl.pallas_call(
        _convert_dtype_kernel,
        out_shape=jax.ShapeDtypeStruct((rows, _LANE_W), dtype),
        grid=grid,
        in_specs=[pl.BlockSpec((tm, _LANE_W), lambda i: (i, 0))],
        out_specs=pl.BlockSpec((tm, _LANE_W), lambda i: (i, 0)),
        compiler_params=pltpu.CompilerParams(
            dimension_semantics=("parallel",),   # shard row tiles across v7x's 2 TCs
            vmem_limit_bytes=32 * 1024 * 1024,   # safe on v5e/v6e/v7x, >> working set
        ),
        cost_estimate=cost,
    )(x2d)

    out_flat = out2d.reshape(-1)
    if padded_total != total:
        out_flat = out_flat[:total]
    return out_flat.reshape(orig_shape)


class ConvertImageDtype:
    """Mirror of the PyTorch module: forward(image, target) -> (image, target)."""

    def __init__(self, dtype=jnp.float32):
        self.dtype = dtype

    def __call__(self, image, target=None):
        return convert_image_dtype(image, self.dtype), target


if __name__ == "__main__":
    key = jax.random.PRNGKey(0)
    # Small NCHW uint8 image: batch=2, channels=4, spatial=16x16.
    image = jax.random.randint(key, (2, 4, 16, 16), 0, 256, dtype=jnp.int32).astype(
        jnp.uint8
    )

    module = ConvertImageDtype(jnp.float32)
    out, tgt = module(image, target=None)
    out = jax.block_until_ready(out)

    # Correctness check against the plain-JAX reference.
    ref = image.astype(jnp.float32) / 255.0
    assert out.shape == (2, 4, 16, 16)
    assert out.dtype == jnp.float32
    assert tgt is None
    assert bool(jnp.allclose(out, ref, atol=1e-6))

    # Also exercise a non-128-aligned spatial size to hit the padding path.
    key2 = jax.random.PRNGKey(1)
    odd = jax.random.randint(key2, (1, 3, 15, 13), 0, 256, dtype=jnp.int32).astype(
        jnp.uint8
    )
    odd_out = jax.block_until_ready(convert_image_dtype(odd, jnp.float32))
    odd_ref = odd.astype(jnp.float32) / 255.0
    assert odd_out.shape == odd.shape
    assert bool(jnp.allclose(odd_out, odd_ref, atol=1e-6))

    print("KERNEL_OK")
</pallas_src>

<mosaic_0001>
module attributes {stable_mosaic.version = 11 : i64} {
  func.func @_convert_dtype_kernel(%arg0: i32, %arg1: memref<2x1024xi8, #tpu.memory_space<vmem>>, %arg2: memref<2x1024xf32, #tpu.memory_space<vmem>>) attributes {dimension_semantics = [#tpu.dimension_semantics<parallel>], iteration_bounds = array<i64: 1>, scalar_prefetch = 0 : i64, scratch_operands = 0 : i64, tpu.core_type = #tpu.core_type<tc>, window_params = [{transform_indices = @transform_0, window_bounds = array<i64: 2, 1024>}, {transform_indices = @transform_1, window_bounds = array<i64: 2, 1024>}]} {
    %c0 = arith.constant 0 : index
    %c0_0 = arith.constant 0 : index
    %0 = vector.load %arg1[%c0, %c0_0] : memref<2x1024xi8, #tpu.memory_space<vmem>>, vector<2x1024xi8>
    %1 = arith.uitofp %0 : vector<2x1024xi8> to vector<2x1024xf32>
    %cst = arith.constant 0.00392156886 : f32
    %2 = vector.broadcast %cst : f32 to vector<2x1024xf32>
    %3 = arith.mulf %1, %2 : vector<2x1024xf32>
    %c0_1 = arith.constant 0 : index
    %c0_2 = arith.constant 0 : index
    %4 = vector.load %arg2[%c0_1, %c0_2] : memref<2x1024xf32, #tpu.memory_space<vmem>>, vector<2x1024xf32>
    tpu.vector_store %arg2[%c0_1, %c0_2], %3 {strides = array<i32>} : memref<2x1024xf32, #tpu.memory_space<vmem>>, vector<2x1024xf32>,
    return
  }
  func.func @transform_0(%arg0: i32) -> (i32, i32) {
    %c0_i32 = arith.constant 0 : i32
    %c0_i32_0 = arith.constant 0 : i32
    return %arg0, %c0_i32 : i32, i32
  }
  func.func @transform_1(%arg0: i32) -> (i32, i32) {
    %c0_i32 = arith.constant 0 : i32
    %c0_i32_0 = arith.constant 0 : i32
    return %arg0, %c0_i32 : i32, i32
  }
}

</mosaic_0001>

<llo_original>
// kernel: tpu_custom_call.1
$region0: #{tpu_custom_call.1}
  #allocation0 [shape = 'u32[]', space=smem, size = 0x4, offset = 0x4, fixed_abs, tag = 'smem constant byte address 0x4 - core index']
  #allocation1 [shape = 'u32[72,128]{1,0:T(1,128)}', space=vmem, size = 0x9000, scoped, tag = 'internal scratch']
  %s0 = inlined_call_operand.hbm [shape: u8[2,1024], index: 0, kind: input, shape index: {}]
  %s1 = inlined_call_operand.hbm [shape: f32[2,1024], index: 1, kind: output, shape index: {}]
  %s2 = sld [smem:[#allocation0]]
  $region18: #{tpu_custom_call.1} parent=0
    _
  %s4 = ssub.s32 1, %s2
  %s5 = scalar_select 0, %s4, %s2
  $region1: #{tpu_custom_call.1} parent=0
    #allocation2 [shape = 'u8[4096]{0}', space=vmem, size = 0x1000, scoped, tag = 'input window, operand 0, single buffered']
    #allocation3 [shape = 's32[1]{0}', space=sflag, size = 0x4, scoped, tag = 'scoped memory for tpu_custom_call.1']
    #allocation4 [shape = 's32[1]{0}', space=sflag, size = 0x4, scoped, tag = 'scoped memory for tpu_custom_call.1']
    #allocation5 [shape = 'u8[8192]{0}', space=vmem, size = 0x2000, scoped, tag = 'output window, operand 0, single buffered']
    %6 = vsyncpa [#allocation3], 0
    %7 = vsyncpa [#allocation4], 0
    // Predicated region
    $region2: #{tpu_custom_call.1} parent=1 // pred_check
      _
    $region3: #{tpu_custom_call.1} parent=1 // pred_check_branch
      %9 = sbr.rel (0) target = $region5
    $region4: #{tpu_custom_call.1} parent=1 // pred_region
      %11 = vsyncadd [#allocation3], 0
      %s13 = sshll.u32 %s0, 4
      %s14 = int_to_ptr.hbm [resolvable:$true] %s13
      %s15 = sshll.u32 [#allocation2], 4
      %s16 = int_to_ptr.vmem [resolvable:$true] %s15
      %18 = dma.hbm_to_vmem [thread:$0]  %s14, 128, %s16, [#allocation3]
    $region5: #{tpu_custom_call.1} parent=1 // pred_fallthru
      _
    // Predicated region
    $region6: #{tpu_custom_call.1} parent=1 // pred_check
      _
    $region7: #{tpu_custom_call.1} parent=1 // pred_check_branch
      %20 = sbr.rel (0) target = $region9
    $region8: #{tpu_custom_call.1} parent=1 // pred_region
      %22 = dma.done [#allocation3], 128
    $region9: #{tpu_custom_call.1} parent=1 // pred_fallthru
      _
    %v23 = vld [vmem:[#allocation2] sm:$0xff]
    %v24 = vunpack.c.0.s8 %v23
    %v25 = vunpack.c.1.s8 %v23
    %v26 = vunpack.c.2.s8 %v23
    %v27 = vunpack.c.3.s8 %v23
    %v28 = vand.u32 %v24, 255
    %v29 = vand.u32 %v25, 255
    %v30 = vand.u32 %v26, 255
    %v31 = vand.u32 %v27, 255
    %v32 = vcvt.s32.f32 %v28
    %v33 = vcvt.s32.f32 %v29
    %v34 = vcvt.s32.f32 %v30
    %v35 = vcvt.s32.f32 %v31
    %v36 = vmul.f32 %v32, 0.003921569
    %v37 = vmul.f32 %v33, 0.003921569
    %v38 = vmul.f32 %v34, 0.003921569
    %v39 = vmul.f32 %v35, 0.003921569
    %v44 = vrot.slane %v36, 2
    %v45 = vrot.slane %v37, 4
    %v46 = vrot.slane %v37, 6
    %v47 = vrot.slane %v38, 2
    %v48 = vrot.slane %v39, 4
    %v49 = vrot.slane %v39, 6
    %vm50 = vcmask 1041408
    %v51 = vsel %vm50, %v36, %v44
    %vm52 = vcmask 1045508
    %v53 = vsel %vm52, %v45, %v46
    %vm54 = vcmask 1043456
    %v55 = vsel %vm54, %v51, %v53
    %v56 = vsel %vm50, %v38, %v47
    %v57 = vsel %vm52, %v48, %v49
    %v58 = vsel %vm54, %v56, %v57
    %61 = vst [vmem:[#allocation5] sm:$0xff] %v55
    %62 = vst [vmem:[#allocation5 + $0x8] sm:$0xff] %v58
    // Predicated region
    $region10: #{tpu_custom_call.1} parent=1 // pred_check
      _
    $region11: #{tpu_custom_call.1} parent=1 // pred_check_branch
      %64 = sbr.rel (0) target = $region13
    $region12: #{tpu_custom_call.1} parent=1 // pred_region
      %66 = vsyncadd [#allocation4], 0
      %s68 = sshll.u32 [#allocation5], 4
      %s69 = int_to_ptr.vmem [resolvable:$true] %s68
      %s70 = sshll.u32 %s1, 4
      %s71 = int_to_ptr.hbm [resolvable:$true] %s70
      %73 = dma.vmem_to_hbm [thread:$0]  %s69, 256, %s71, [#allocation4]
    $region13: #{tpu_custom_call.1} parent=1 // pred_fallthru
      _
    // Predicated region
    $region14: #{tpu_custom_call.1} parent=1 // pred_check
      _
    $region15: #{tpu_custom_call.1} parent=1 // pred_check_branch
      %75 = sbr.rel (0) target = $region17
    $region16: #{tpu_custom_call.1} parent=1 // pred_region
      %77 = dma.done [#allocation4], 256
    $region17: #{tpu_custom_call.1} parent=1 // pred_fallthru
      _
    %78 = vsyncpa [#allocation3], 1
    %79 = vsyncpa [#allocation4], 1

</llo_original>
